<compile_context>
chip_gen: v5e
topology: v5e:2x2
jax: 0.10.0
libtpu: 0.0.40
codegen_flags: <defaults>
</compile_context>

<pallas_src>
import jax
import jax.numpy as jnp
from jax.experimental import pallas as pl
from jax.experimental.pallas import tpu as pltpu

# ---- module constants (from the PyTorch source) ----
END_TOKEN = '<END>'
PADDING_TOKEN = '<PAD>'
START_TOKEN = '<START>'
D_MODEL = 50
LANGUAGE_TO_INDEX = {'<PAD>': 0, '<START>': 1, '<END>': 2, 'H': 3, 'e': 4,
                     'l': 5, 'o': 6, ' ': 7, 'W': 8, 'r': 9, 'd': 10}
MAX_SEQUENCE_LENGTH = 20
VOCAB_SIZE = len(LANGUAGE_TO_INDEX)
LANE = 128   # lane-dense output width (d_model padded 50 -> 128, sliced back in the wrapper)
SUB = 8      # sublane multiple for row padding


# ---------------- glue: tokenization (pure Python, mirrors batch_tokenize) ----------------
def batch_tokenize(batch, start_token, end_token):
    pad = LANGUAGE_TO_INDEX[PADDING_TOKEN]
    rows = []
    for sentence in batch:
        # Unknown characters map to PAD via .get(..., PAD) exactly like the PyTorch code,
        # so out-of-vocab ids never reach the kernel.
        idx = [LANGUAGE_TO_INDEX.get(tok, pad) for tok in sentence]
        if start_token:
            idx.insert(0, LANGUAGE_TO_INDEX[START_TOKEN])
        if end_token:
            idx.append(LANGUAGE_TO_INDEX[END_TOKEN])
        while len(idx) < MAX_SEQUENCE_LENGTH:
            idx.append(pad)
        rows.append(idx[:MAX_SEQUENCE_LENGTH])
    return jnp.asarray(rows, dtype=jnp.int32)


# ---------------- glue: sinusoidal positional encoding constants ----------------
def position_encoder(max_seq_len=MAX_SEQUENCE_LENGTH, d_model=D_MODEL):
    even_i = jnp.arange(0, d_model, 2, dtype=jnp.float32)           # (d/2,)
    denominator = jnp.power(10000.0, even_i / d_model)              # (d/2,)
    position = jnp.arange(max_seq_len, dtype=jnp.float32)[:, None]  # (S, 1)
    even_pe = jnp.sin(position / denominator)                       # (S, d/2)
    odd_pe = jnp.cos(position / denominator)                        # (S, d/2)
    stacked = jnp.stack([even_pe, odd_pe], axis=2)                  # (S, d/2, 2)
    return stacked.reshape(max_seq_len, d_model)                    # (S, D)


# ---------------- Pallas kernel: fused embedding gather + positional-encoding add ----------------
def embed_kernel(tok_ref, posid_ref, table_ref, out_ref):
    # tok_ref:   (BSp, 1) int32  -- token id per flattened (batch, position), sublane-major column
    # posid_ref: (BSp, 1) int32  -- V + (position within sequence)
    # table_ref: (Kp, 128) f32   -- rows [0,V): embedding table, rows [V, V+S): positional
    #                               encoding, rows [V+S, Kp): zero padding (never selected)
    # out_ref:   (BSp, 128) f32  -- lane-dense 2-D output block
    bs = out_ref.shape[0]
    k = table_ref.shape[0]
    col = jax.lax.broadcasted_iota(jnp.int32, (bs, k), 1)
    # Each row of `sel` one-hots exactly two disjoint rows of the combined table (token row +
    # position row), so a single MXU matmul performs the embedding gather AND the "+ pos" add.
    sel = ((col == tok_ref[...]) | (col == posid_ref[...])).astype(table_ref.dtype)
    out_ref[...] = jnp.dot(sel, table_ref[...],
                           precision=jax.lax.Precision.HIGHEST,
                           preferred_element_type=jnp.float32).astype(out_ref.dtype)


def sentence_embedding_forward(batch, embedding_table, start_token=True, end_token=True):
    tokens = batch_tokenize(batch, start_token, end_token)          # (B, S) int32
    B, S = tokens.shape
    V, D = embedding_table.shape
    BS = B * S
    BSp = ((BS + SUB - 1) // SUB) * SUB                              # sublane-padded row count
    Kp = ((V + S + SUB - 1) // SUB) * SUB                            # sublane-padded table rows

    pos = position_encoder(S, D).astype(jnp.float32)                 # (S, D)
    # Combined lookup table: embeddings on top, positional encodings below; pad rows -> Kp,
    # lanes -> 128. Padded rows are zero and never selected (ids stay < V+S).
    table = jnp.concatenate([embedding_table.astype(jnp.float32), pos], axis=0)   # (V+S, D)
    table = jnp.pad(table, ((0, Kp - (V + S)), (0, LANE - D)))                     # (Kp, 128)

    # Wrapper-side layout plumbing (free): sublane-major token / position-index columns,
    # row-padded to a multiple of 8. Padding rows use id 0 (harmless; sliced off below).
    tok_col = tokens.reshape(BS).astype(jnp.int32)                                 # (BS,)
    pos_col = V + (jnp.arange(BS, dtype=jnp.int32) % S)                            # (BS,)
    tok_col = jnp.pad(tok_col, (0, BSp - BS)).reshape(BSp, 1)                      # (BSp, 1)
    pos_col = jnp.pad(pos_col, (0, BSp - BS)).reshape(BSp, 1)                      # (BSp, 1)

    out_flat = pl.pallas_call(
        embed_kernel,
        out_shape=jax.ShapeDtypeStruct((BSp, LANE), jnp.float32),
        grid=(1,),                                                   # single step: whole problem fits VMEM
        in_specs=[
            pl.BlockSpec((BSp, 1), lambda i: (0, 0)),                # token ids (full block)
            pl.BlockSpec((BSp, 1), lambda i: (0, 0)),                # position-row ids (full block)
            pl.BlockSpec((Kp, LANE), lambda i: (0, 0)),              # combined table (full block)
        ],
        out_specs=pl.BlockSpec((BSp, LANE), lambda i: (0, 0)),       # lane-dense 2-D output
        compiler_params=pltpu.CompilerParams(
            dimension_semantics=("arbitrary",)),
    )(tok_col, pos_col, table)

    # Undo the row/lane padding and restore the (B, S, D) PyTorch layout in the wrapper.
    out = out_flat[:BS, :D].reshape(B, S, D)

    # self.dropout(...): eval-mode dropout is the identity.
    # TODO(synk): training-mode dropout (p=0.1) with PRNG is not applied here.
    return out


if __name__ == "__main__":
    # deterministic parameter init: nn.Embedding default ~ N(0, 1)
    key = jax.random.PRNGKey(0)
    embedding_table = jax.random.normal(key, (VOCAB_SIZE, D_MODEL), dtype=jnp.float32)

    batch = ["Hello World", "Hello"]
    out = sentence_embedding_forward(batch, embedding_table,
                                     start_token=True, end_token=True)
    out = jax.block_until_ready(out)

    # sanity: shape/dtype + pure-JAX reference (gather + pos broadcast add)
    assert out.shape == (len(batch), MAX_SEQUENCE_LENGTH, D_MODEL)
    assert out.dtype == jnp.float32
    tokens = batch_tokenize(batch, True, True)
    ref = jnp.take(embedding_table, tokens, axis=0) + position_encoder()[None, :, :]
    assert jnp.allclose(out, ref, atol=1e-2, rtol=1e-2), "mismatch vs JAX reference"

    print("KERNEL_OK")
</pallas_src>

<mosaic_0001>
module attributes {stable_mosaic.version = 11 : i64} {
  func.func @embed_kernel(%arg0: i32, %arg1: memref<40x1xi32, #tpu.memory_space<vmem>>, %arg2: memref<40x1xi32, #tpu.memory_space<vmem>>, %arg3: memref<32x128xf32, #tpu.memory_space<vmem>>, %arg4: memref<40x128xf32, #tpu.memory_space<vmem>>) attributes {dimension_semantics = [#tpu.dimension_semantics<arbitrary>], iteration_bounds = array<i64: 1>, scalar_prefetch = 0 : i64, scratch_operands = 0 : i64, tpu.core_type = #tpu.core_type<tc>, window_params = [{pipeline_mode = #tpu.pipeline_mode<synchronous>, transform_indices = @transform_0, window_bounds = array<i64: 40, 1>}, {pipeline_mode = #tpu.pipeline_mode<synchronous>, transform_indices = @transform_1, window_bounds = array<i64: 40, 1>}, {pipeline_mode = #tpu.pipeline_mode<synchronous>, transform_indices = @transform_2, window_bounds = array<i64: 32, 128>}, {pipeline_mode = #tpu.pipeline_mode<synchronous>, transform_indices = @transform_3, window_bounds = array<i64: 40, 128>}]} {
    %0 = tpu.iota {dimensions = array<i32: 1>} : vector<40x32xi32>
    %c0 = arith.constant 0 : index
    %c0_0 = arith.constant 0 : index
    %1 = vector.load %arg1[%c0, %c0_0] : memref<40x1xi32, #tpu.memory_space<vmem>>, vector<40x1xi32>
    %2 = vector.broadcast %1 : vector<40x1xi32> to vector<40x32xi32>
    %3 = arith.cmpi eq, %0, %2 : vector<40x32xi32>
    %c0_1 = arith.constant 0 : index
    %c0_2 = arith.constant 0 : index
    %4 = vector.load %arg2[%c0_1, %c0_2] : memref<40x1xi32, #tpu.memory_space<vmem>>, vector<40x1xi32>
    %5 = vector.broadcast %4 : vector<40x1xi32> to vector<40x32xi32>
    %6 = arith.cmpi eq, %0, %5 : vector<40x32xi32>
    %7 = arith.ori %3, %6 : vector<40x32xi1>
    %8 = arith.extui %7 : vector<40x32xi1> to vector<40x32xi32>
    %9 = arith.sitofp %8 : vector<40x32xi32> to vector<40x32xf32>
    %c0_3 = arith.constant 0 : index
    %c0_4 = arith.constant 0 : index
    %10 = vector.load %arg3[%c0_3, %c0_4] : memref<32x128xf32, #tpu.memory_space<vmem>>, vector<32x128xf32>
    %cst = arith.constant dense<0.000000e+00> : vector<40x128xf32>
    %11 = tpu.matmul %9, %10, %cst {dimension_numbers = #tpu.dot_dimension_numbers<[1], [0], [0], [1], [0, 0, 1, 1], [], []>, precision = #tpu.contract_precision<fp32>} : vector<40x32xf32>, vector<32x128xf32>, vector<40x128xf32> -> vector<40x128xf32>
    %c0_5 = arith.constant 0 : index
    %c0_6 = arith.constant 0 : index
    %12 = vector.load %arg4[%c0_5, %c0_6] : memref<40x128xf32, #tpu.memory_space<vmem>>, vector<40x128xf32>
    tpu.vector_store %arg4[%c0_5, %c0_6], %11 {strides = array<i32>} : memref<40x128xf32, #tpu.memory_space<vmem>>, vector<40x128xf32>,
    return
  }
  func.func @transform_0(%arg0: i32) -> (i32, i32) {
    %c0_i32 = arith.constant 0 : i32
    %c0_i32_0 = arith.constant 0 : i32
    %c0_i32_1 = arith.constant 0 : i32
    return %c0_i32, %c0_i32_0 : i32, i32
  }
  func.func @transform_1(%arg0: i32) -> (i32, i32) {
    %c0_i32 = arith.constant 0 : i32
    %c0_i32_0 = arith.constant 0 : i32
    %c0_i32_1 = arith.constant 0 : i32
    return %c0_i32, %c0_i32_0 : i32, i32
  }
  func.func @transform_2(%arg0: i32) -> (i32, i32) {
    %c0_i32 = arith.constant 0 : i32
    %c0_i32_0 = arith.constant 0 : i32
    %c0_i32_1 = arith.constant 0 : i32
    return %c0_i32, %c0_i32_0 : i32, i32
  }
  func.func @transform_3(%arg0: i32) -> (i32, i32) {
    %c0_i32 = arith.constant 0 : i32
    %c0_i32_0 = arith.constant 0 : i32
    %c0_i32_1 = arith.constant 0 : i32
    return %c0_i32, %c0_i32_0 : i32, i32
  }
}

</mosaic_0001>

<llo_original>
// kernel: tpu_custom_call.1
$region0: #{tpu_custom_call.1}
  #allocation0 [shape = 'u32[]', space=smem, size = 0x4, offset = 0x4, fixed_abs, tag = 'smem constant byte address 0x4 - core index']
  #allocation1 [shape = 'u32[72,128]{1,0:T(1,128)}', space=vmem, size = 0x9000, scoped, tag = 'internal scratch']
  %s0 = inlined_call_operand.vmem [shape: s32[40,1], index: 0, kind: input, shape index: {}]
  %s1 = inlined_call_operand.vmem [shape: s32[40,1], index: 1, kind: input, shape index: {}]
  %s2 = inlined_call_operand.vmem [shape: f32[32,128], index: 2, kind: input, shape index: {}]
  %s3 = inlined_call_operand.hbm [shape: f32[40,128], index: 3, kind: output, shape index: {}]
  %s4 = sld [smem:[#allocation0]]
  $region22: #{tpu_custom_call.1} parent=0
    _
  %s6 = ssub.s32 1, %s4
  %s7 = scalar_select 0, %s6, %s4
  $region1: #{tpu_custom_call.1} parent=0
    #allocation2 [shape = 'u8[20480]{0}', space=vmem, size = 0x5000, scoped, tag = 'output window, operand 0, single buffered']
    #allocation3 [shape = 's32[1]{0}', space=sflag, size = 0x4, scoped, tag = 'scoped memory for tpu_custom_call.1']
    %8 = vsyncpa [#allocation3], 0
    // Predicated region
    $region2: #{tpu_custom_call.1} parent=1 // pred_check
      _
    $region3: #{tpu_custom_call.1} parent=1 // pred_check_branch
      %10 = sbr.rel (0) target = $region5
    $region4: #{tpu_custom_call.1} parent=1 // pred_region
      _
    $region5: #{tpu_custom_call.1} parent=1 // pred_fallthru
      _
    // Predicated region
    $region6: #{tpu_custom_call.1} parent=1 // pred_check
      _
    $region7: #{tpu_custom_call.1} parent=1 // pred_check_branch
      %12 = sbr.rel (0) target = $region9
    $region8: #{tpu_custom_call.1} parent=1 // pred_region
      _
    $region9: #{tpu_custom_call.1} parent=1 // pred_fallthru
      _
    // Predicated region
    $region10: #{tpu_custom_call.1} parent=1 // pred_check
      _
    $region11: #{tpu_custom_call.1} parent=1 // pred_check_branch
      %14 = sbr.rel (0) target = $region13
    $region12: #{tpu_custom_call.1} parent=1 // pred_region
      _
    $region13: #{tpu_custom_call.1} parent=1 // pred_fallthru
      _
    %v15 = vlaneseq
    %v16 = vand.u32 %v15, 127
    %v17 = vld [vmem:[%s0] sm:$0xff]
    %v18 = vld [vmem:[%s0 + $0x8] sm:$0xff]
    %v19 = vld [vmem:[%s0 + $0x10] sm:$0xff]
    %v20 = vld [vmem:[%s0 + $0x18] sm:$0xff]
    %v21 = vld [vmem:[%s0 + $0x20] sm:$0xff]
    %22 = vset.pattern.permute.xlu0 0
    %23 = vperm.xlu0 %22, %v17
    %v24 = vpop.permute.xlu0 %23
    %25 = vset.pattern.permute.xlu0 0
    %26 = vperm.xlu0 %25, %v18
    %v27 = vpop.permute.xlu0 %26
    %28 = vset.pattern.permute.xlu0 0
    %29 = vperm.xlu0 %28, %v19
    %v30 = vpop.permute.xlu0 %29
    %31 = vset.pattern.permute.xlu0 0
    %32 = vperm.xlu0 %31, %v20
    %v33 = vpop.permute.xlu0 %32
    %34 = vset.pattern.permute.xlu0 0
    %35 = vperm.xlu0 %34, %v21
    %v36 = vpop.permute.xlu0 %35
    %vm37 = vcmp.eq.s32.totalorder %v16, %v24
    %vm38 = vcmp.eq.s32.totalorder %v16, %v27
    %vm39 = vcmp.eq.s32.totalorder %v16, %v30
    %vm40 = vcmp.eq.s32.totalorder %v16, %v33
    %vm41 = vcmp.eq.s32.totalorder %v16, %v36
    %v42 = vld [vmem:[%s1] sm:$0xff]
    %v43 = vld [vmem:[%s1 + $0x8] sm:$0xff]
    %v44 = vld [vmem:[%s1 + $0x10] sm:$0xff]
    %v45 = vld [vmem:[%s1 + $0x18] sm:$0xff]
    %v46 = vld [vmem:[%s1 + $0x20] sm:$0xff]
    %47 = vset.pattern.permute.xlu0 0
    %48 = vperm.xlu0 %47, %v42
    %v49 = vpop.permute.xlu0 %48
    %50 = vset.pattern.permute.xlu0 0
    %51 = vperm.xlu0 %50, %v43
    %v52 = vpop.permute.xlu0 %51
    %53 = vset.pattern.permute.xlu0 0
    %54 = vperm.xlu0 %53, %v44
    %v55 = vpop.permute.xlu0 %54
    %56 = vset.pattern.permute.xlu0 0
    %57 = vperm.xlu0 %56, %v45
    %v58 = vpop.permute.xlu0 %57
    %59 = vset.pattern.permute.xlu0 0
    %60 = vperm.xlu0 %59, %v46
    %v61 = vpop.permute.xlu0 %60
    %vm62 = vcmp.eq.s32.totalorder %v16, %v49
    %vm63 = vcmp.eq.s32.totalorder %v16, %v52
    %vm64 = vcmp.eq.s32.totalorder %v16, %v55
    %vm65 = vcmp.eq.s32.totalorder %v16, %v58
    %vm66 = vcmp.eq.s32.totalorder %v16, %v61
    %vm67 = vmor %vm37, %vm62
    %vm68 = vmor %vm38, %vm63
    %vm69 = vmor %vm39, %vm64
    %vm70 = vmor %vm40, %vm65
    %vm71 = vmor %vm41, %vm66
    %v72 = vsel %vm67, 1, 0
    %v73 = vsel %vm68, 1, 0
    %v74 = vsel %vm69, 1, 0
    %v75 = vsel %vm70, 1, 0
    %v76 = vsel %vm71, 1, 0
    %v77 = vcvt.s32.f32 %v72
    %v78 = vcvt.s32.f32 %v73
    %v79 = vcvt.s32.f32 %v74
    %v80 = vcvt.s32.f32 %v75
    %v81 = vcvt.s32.f32 %v76
    %v82 = vld [vmem:[%s2] sm:$0xff]
    %v83 = vld [vmem:[%s2 + $0x8] sm:$0xff]
    %v84 = vld [vmem:[%s2 + $0x10] sm:$0xff]
    %v85 = vld [vmem:[%s2 + $0x18] sm:$0xff]
    %vm86 = vcmask 261120
    %v88 = vsel %vm86, %v77, 0
    %v91 = vsel %vm86, %v78, 0
    %v94 = vsel %vm86, %v79, 0
    %v97 = vsel %vm86, %v80, 0
    %v100 = vsel %vm86, %v81, 0
    %102 = vmatpush.msra.mxu0 0.0
    %103 = vmatpush.msra.mxu0 0.0
    %104 = vmatpush.msra.mxu0 0.0
    %105 = vmatpush.msra.mxu0 0.0
    %106 = vmatpush.msra.mxu0 0.0
    %107 = vmatpush.msra.mxu0 0.0
    %108 = vmatpush.msra.mxu0 0.0
    %109 = vmatpush.msra.mxu0 0.0
    %110 = vmatpush.msra.mxu0 0.0
    %111 = vmatpush.msra.mxu0 0.0
    %112 = vmatpush.msra.mxu0 0.0
    %113 = vmatpush.msra.mxu0 0.0
    %v114 = vand.u32 %v85, 4294901760
    %115 = vmatpush.msra.mxu0 %v114
    %v116 = vand.u32 %v84, 4294901760
    %117 = vmatpush.msra.mxu0 %v116
    %v118 = vand.u32 %v83, 4294901760
    %119 = vmatpush.msra.mxu0 %v118
    %v120 = vand.u32 %v82, 4294901760
    %121 = vmatpush.msra.mxu0 %v120
    %v122 = vand.u32 %v88, 4294901760
    %v123 = vsub.f32 %v88, %v122
    %v124 = vand.u32 %v123, 4294901760
    %v125 = vsub.f32 %v123, %v124
    %v126 = vand.u32 %v125, 4294901760
    %127 = vmatmul.f32.gmra.mxu0 %v126
    %v128 = vpop.f32.mrf.mxu0
    %v129 = vadd.f32 0.0, %v128
    %v130 = vand.u32 %v91, 4294901760
    %v131 = vsub.f32 %v91, %v130
    %v132 = vand.u32 %v131, 4294901760
    %v133 = vsub.f32 %v131, %v132
    %v134 = vand.u32 %v133, 4294901760
    %135 = vmatmul.f32.gmra.mxu0 %v134
    %v136 = vpop.f32.mrf.mxu0
    %v137 = vadd.f32 0.0, %v136
    %v138 = vand.u32 %v94, 4294901760
    %v139 = vsub.f32 %v94, %v138
    %v140 = vand.u32 %v139, 4294901760
    %v141 = vsub.f32 %v139, %v140
    %v142 = vand.u32 %v141, 4294901760
    %143 = vmatmul.f32.gmra.mxu0 %v142
    %v144 = vpop.f32.mrf.mxu0
    %v145 = vadd.f32 0.0, %v144
    %v146 = vand.u32 %v97, 4294901760
    %v147 = vsub.f32 %v97, %v146
    %v148 = vand.u32 %v147, 4294901760
    %v149 = vsub.f32 %v147, %v148
    %v150 = vand.u32 %v149, 4294901760
    %151 = vmatmul.f32.gmra.mxu0 %v150
    %v152 = vpop.f32.mrf.mxu0
    %v153 = vadd.f32 0.0, %v152
    %v154 = vand.u32 %v100, 4294901760
    %v155 = vsub.f32 %v100, %v154
    %v156 = vand.u32 %v155, 4294901760
    %v157 = vsub.f32 %v155, %v156
    %v158 = vand.u32 %v157, 4294901760
    %159 = vmatmul.f32.gmra.mxu0 %v158
    %v160 = vpop.f32.mrf.mxu0
    %v161 = vadd.f32 0.0, %v160
    %162 = vdwg.mxu0
    %163 = vmatpush.msra.mxu0 0.0
    %164 = vmatpush.msra.mxu0 0.0
    %165 = vmatpush.msra.mxu0 0.0
    %166 = vmatpush.msra.mxu0 0.0
    %167 = vmatpush.msra.mxu0 0.0
    %168 = vmatpush.msra.mxu0 0.0
    %169 = vmatpush.msra.mxu0 0.0
    %170 = vmatpush.msra.mxu0 0.0
    %171 = vmatpush.msra.mxu0 0.0
    %172 = vmatpush.msra.mxu0 0.0
    %173 = vmatpush.msra.mxu0 0.0
    %174 = vmatpush.msra.mxu0 0.0
    %v175 = vand.u32 %v85, 4294901760
    %v176 = vsub.f32 %v85, %v175
    %v177 = vand.u32 %v176, 4294901760
    %v178 = vsub.f32 %v176, %v177
    %v179 = vand.u32 %v178, 4294901760
    %180 = vmatpush.msra.mxu0 %v179
    %v181 = vand.u32 %v84, 4294901760
    %v182 = vsub.f32 %v84, %v181
    %v183 = vand.u32 %v182, 4294901760
    %v184 = vsub.f32 %v182, %v183
    %v185 = vand.u32 %v184, 4294901760
    %186 = vmatpush.msra.mxu0 %v185
    %v187 = vand.u32 %v83, 4294901760
    %v188 = vsub.f32 %v83, %v187
    %v189 = vand.u32 %v188, 4294901760
    %v190 = vsub.f32 %v188, %v189
    %v191 = vand.u32 %v190, 4294901760
    %192 = vmatpush.msra.mxu0 %v191
    %v193 = vand.u32 %v82, 4294901760
    %v194 = vsub.f32 %v82, %v193
    %v195 = vand.u32 %v194, 4294901760
    %v196 = vsub.f32 %v194, %v195
    %v197 = vand.u32 %v196, 4294901760
    %198 = vmatpush.msra.mxu0 %v197
    %v199 = vand.u32 %v88, 4294901760
    %200 = vmatmul.f32.gmra.mxu0 %v199
    %v201 = vpop.f32.mrf.mxu0
    %v202 = vadd.f32 %v129, %v201
    %v203 = vand.u32 %v91, 4294901760
    %204 = vmatmul.f32.gmra.mxu0 %v203
    %v205 = vpop.f32.mrf.mxu0
    %v206 = vadd.f32 %v137, %v205
    %v207 = vand.u32 %v94, 4294901760
    %208 = vmatmul.f32.gmra.mxu0 %v207
    %v209 = vpop.f32.mrf.mxu0
    %v210 = vadd.f32 %v145, %v209
    %v211 = vand.u32 %v97, 4294901760
    %212 = vmatmul.f32.gmra.mxu0 %v211
    %v213 = vpop.f32.mrf.mxu0
    %v214 = vadd.f32 %v153, %v213
    %v215 = vand.u32 %v100, 4294901760
    %216 = vmatmul.f32.gmra.mxu0 %v215
    %v217 = vpop.f32.mrf.mxu0
    %v218 = vadd.f32 %v161, %v217
    %219 = vdwg.mxu0
    %220 = vmatpush.msra.mxu0 0.0
    %221 = vmatpush.msra.mxu0 0.0
    %222 = vmatpush.msra.mxu0 0.0
    %223 = vmatpush.msra.mxu0 0.0
    %224 = vmatpush.msra.mxu0 0.0
    %225 = vmatpush.msra.mxu0 0.0
    %226 = vmatpush.msra.mxu0 0.0
    %227 = vmatpush.msra.mxu0 0.0
    %228 = vmatpush.msra.mxu0 0.0
    %229 = vmatpush.msra.mxu0 0.0
    %230 = vmatpush.msra.mxu0 0.0
    %231 = vmatpush.msra.mxu0 0.0
    %v232 = vand.u32 %v85, 4294901760
    %v233 = vsub.f32 %v85, %v232
    %234 = vmatpush.msra.mxu0 %v233
    %v235 = vand.u32 %v84, 4294901760
    %v236 = vsub.f32 %v84, %v235
    %237 = vmatpush.msra.mxu0 %v236
    %v238 = vand.u32 %v83, 4294901760
    %v239 = vsub.f32 %v83, %v238
    %240 = vmatpush.msra.mxu0 %v239
    %v241 = vand.u32 %v82, 4294901760
    %v242 = vsub.f32 %v82, %v241
    %243 = vmatpush.msra.mxu0 %v242
    %v244 = vand.u32 %v88, 4294901760
    %v245 = vsub.f32 %v88, %v244
    %246 = vmatmul.f32.gmra.mxu0 %v245
    %v247 = vpop.f32.mrf.mxu0
    %v248 = vadd.f32 %v202, %v247
    %v249 = vand.u32 %v91, 4294901760
    %v250 = vsub.f32 %v91, %v249
    %251 = vmatmul.f32.gmra.mxu0 %v250
    %v252 = vpop.f32.mrf.mxu0
    %v253 = vadd.f32 %v206, %v252
    %v254 = vand.u32 %v94, 4294901760
    %v255 = vsub.f32 %v94, %v254
    %256 = vmatmul.f32.gmra.mxu0 %v255
    %v257 = vpop.f32.mrf.mxu0
    %v258 = vadd.f32 %v210, %v257
    %v259 = vand.u32 %v97, 4294901760
    %v260 = vsub.f32 %v97, %v259
    %261 = vmatmul.f32.gmra.mxu0 %v260
    %v262 = vpop.f32.mrf.mxu0
    %v263 = vadd.f32 %v214, %v262
    %v264 = vand.u32 %v100, 4294901760
    %v265 = vsub.f32 %v100, %v264
    %266 = vmatmul.f32.gmra.mxu0 %v265
    %v267 = vpop.f32.mrf.mxu0
    %v268 = vadd.f32 %v218, %v267
    %269 = vdwg.mxu0
    %270 = vmatpush.msra.mxu0 0.0
    %271 = vmatpush.msra.mxu0 0.0
    %272 = vmatpush.msra.mxu0 0.0
    %273 = vmatpush.msra.mxu0 0.0
    %274 = vmatpush.msra.mxu0 0.0
    %275 = vmatpush.msra.mxu0 0.0
    %276 = vmatpush.msra.mxu0 0.0
    %277 = vmatpush.msra.mxu0 0.0
    %278 = vmatpush.msra.mxu0 0.0
    %279 = vmatpush.msra.mxu0 0.0
    %280 = vmatpush.msra.mxu0 0.0
    %281 = vmatpush.msra.mxu0 0.0
    %v282 = vand.u32 %v85, 4294901760
    %283 = vmatpush.msra.mxu0 %v282
    %v284 = vand.u32 %v84, 4294901760
    %285 = vmatpush.msra.mxu0 %v284
    %v286 = vand.u32 %v83, 4294901760
    %287 = vmatpush.msra.mxu0 %v286
    %v288 = vand.u32 %v82, 4294901760
    %289 = vmatpush.msra.mxu0 %v288
    %v290 = vand.u32 %v88, 4294901760
    %v291 = vsub.f32 %v88, %v290
    %v292 = vand.u32 %v291, 4294901760
    %293 = vmatmul.f32.gmra.mxu0 %v292
    %v294 = vpop.f32.mrf.mxu0
    %v295 = vadd.f32 %v248, %v294
    %v296 = vand.u32 %v91, 4294901760
    %v297 = vsub.f32 %v91, %v296
    %v298 = vand.u32 %v297, 4294901760
    %299 = vmatmul.f32.gmra.mxu0 %v298
    %v300 = vpop.f32.mrf.mxu0
    %v301 = vadd.f32 %v253, %v300
    %v302 = vand.u32 %v94, 4294901760
    %v303 = vsub.f32 %v94, %v302
    %v304 = vand.u32 %v303, 4294901760
    %305 = vmatmul.f32.gmra.mxu0 %v304
    %v306 = vpop.f32.mrf.mxu0
    %v307 = vadd.f32 %v258, %v306
    %v308 = vand.u32 %v97, 4294901760
    %v309 = vsub.f32 %v97, %v308
    %v310 = vand.u32 %v309, 4294901760
    %311 = vmatmul.f32.gmra.mxu0 %v310
    %v312 = vpop.f32.mrf.mxu0
    %v313 = vadd.f32 %v263, %v312
    %v314 = vand.u32 %v100, 4294901760
    %v315 = vsub.f32 %v100, %v314
    %v316 = vand.u32 %v315, 4294901760
    %317 = vmatmul.f32.gmra.mxu0 %v316
    %v318 = vpop.f32.mrf.mxu0
    %v319 = vadd.f32 %v268, %v318
    %320 = vdwg.mxu0
    %321 = vmatpush.msra.mxu0 0.0
    %322 = vmatpush.msra.mxu0 0.0
    %323 = vmatpush.msra.mxu0 0.0
    %324 = vmatpush.msra.mxu0 0.0
    %325 = vmatpush.msra.mxu0 0.0
    %326 = vmatpush.msra.mxu0 0.0
    %327 = vmatpush.msra.mxu0 0.0
    %328 = vmatpush.msra.mxu0 0.0
    %329 = vmatpush.msra.mxu0 0.0
    %330 = vmatpush.msra.mxu0 0.0
    %331 = vmatpush.msra.mxu0 0.0
    %332 = vmatpush.msra.mxu0 0.0
    %v333 = vand.u32 %v85, 4294901760
    %v334 = vsub.f32 %v85, %v333
    %v335 = vand.u32 %v334, 4294901760
    %336 = vmatpush.msra.mxu0 %v335
    %v337 = vand.u32 %v84, 4294901760
    %v338 = vsub.f32 %v84, %v337
    %v339 = vand.u32 %v338, 4294901760
    %340 = vmatpush.msra.mxu0 %v339
    %v341 = vand.u32 %v83, 4294901760
    %v342 = vsub.f32 %v83, %v341
    %v343 = vand.u32 %v342, 4294901760
    %344 = vmatpush.msra.mxu0 %v343
    %v345 = vand.u32 %v82, 4294901760
    %v346 = vsub.f32 %v82, %v345
    %v347 = vand.u32 %v346, 4294901760
    %348 = vmatpush.msra.mxu0 %v347
    %v349 = vand.u32 %v88, 4294901760
    %350 = vmatmul.f32.gmra.mxu0 %v349
    %v351 = vpop.f32.mrf.mxu0
    %v352 = vadd.f32 %v295, %v351
    %v353 = vand.u32 %v91, 4294901760
    %354 = vmatmul.f32.gmra.mxu0 %v353
    %v355 = vpop.f32.mrf.mxu0
    %v356 = vadd.f32 %v301, %v355
    %v357 = vand.u32 %v94, 4294901760
    %358 = vmatmul.f32.gmra.mxu0 %v357
    %v359 = vpop.f32.mrf.mxu0
    %v360 = vadd.f32 %v307, %v359
    %v361 = vand.u32 %v97, 4294901760
    %362 = vmatmul.f32.gmra.mxu0 %v361
    %v363 = vpop.f32.mrf.mxu0
    %v364 = vadd.f32 %v313, %v363
    %v365 = vand.u32 %v100, 4294901760
    %366 = vmatmul.f32.gmra.mxu0 %v365
    %v367 = vpop.f32.mrf.mxu0
    %v368 = vadd.f32 %v319, %v367
    %369 = vdwg.mxu0
    %370 = vmatpush.msra.mxu0 0.0
    %371 = vmatpush.msra.mxu0 0.0
    %372 = vmatpush.msra.mxu0 0.0
    %373 = vmatpush.msra.mxu0 0.0
    %374 = vmatpush.msra.mxu0 0.0
    %375 = vmatpush.msra.mxu0 0.0
    %376 = vmatpush.msra.mxu0 0.0
    %377 = vmatpush.msra.mxu0 0.0
    %378 = vmatpush.msra.mxu0 0.0
    %379 = vmatpush.msra.mxu0 0.0
    %380 = vmatpush.msra.mxu0 0.0
    %381 = vmatpush.msra.mxu0 0.0
    %v382 = vand.u32 %v85, 4294901760
    %383 = vmatpush.msra.mxu0 %v382
    %v384 = vand.u32 %v84, 4294901760
    %385 = vmatpush.msra.mxu0 %v384
    %v386 = vand.u32 %v83, 4294901760
    %387 = vmatpush.msra.mxu0 %v386
    %v388 = vand.u32 %v82, 4294901760
    %389 = vmatpush.msra.mxu0 %v388
    %v390 = vand.u32 %v88, 4294901760
    %391 = vmatmul.f32.gmra.mxu0 %v390
    %v392 = vpop.f32.mrf.mxu0
    %v393 = vadd.f32 %v352, %v392
    %v394 = vand.u32 %v91, 4294901760
    %395 = vmatmul.f32.gmra.mxu0 %v394
    %v396 = vpop.f32.mrf.mxu0
    %v397 = vadd.f32 %v356, %v396
    %v398 = vand.u32 %v94, 4294901760
    %399 = vmatmul.f32.gmra.mxu0 %v398
    %v400 = vpop.f32.mrf.mxu0
    %v401 = vadd.f32 %v360, %v400
    %v402 = vand.u32 %v97, 4294901760
    %403 = vmatmul.f32.gmra.mxu0 %v402
    %v404 = vpop.f32.mrf.mxu0
    %v405 = vadd.f32 %v364, %v404
    %v406 = vand.u32 %v100, 4294901760
    %407 = vmatmul.f32.gmra.mxu0 %v406
    %v408 = vpop.f32.mrf.mxu0
    %v409 = vadd.f32 %v368, %v408
    %410 = vdwg.mxu0
    %411 = vst [vmem:[#allocation2] sm:$0xff] %v393
    %412 = vst [vmem:[#allocation2 + $0x8] sm:$0xff] %v397
    %413 = vst [vmem:[#allocation2 + $0x10] sm:$0xff] %v401
    %414 = vst [vmem:[#allocation2 + $0x18] sm:$0xff] %v405
    %415 = vst [vmem:[#allocation2 + $0x20] sm:$0xff] %v409
    // Predicated region
    $region14: #{tpu_custom_call.1} parent=1 // pred_check
      _
    $region15: #{tpu_custom_call.1} parent=1 // pred_check_branch
      %417 = sbr.rel (0) target = $region17
    $region16: #{tpu_custom_call.1} parent=1 // pred_region
      %419 = vsyncadd [#allocation3], 0
      %s420 = sshll.u32 [#allocation2], 4
      %s421 = int_to_ptr.vmem [resolvable:$true] %s420
      %s422 = sshll.u32 %s3, 4
      %s423 = int_to_ptr.hbm [resolvable:$true] %s422
      %428 = dma.vmem_to_hbm [thread:$0]  %s421, 640, %s423, [#allocation3], 128, 128, 8
    $region17: #{tpu_custom_call.1} parent=1 // pred_fallthru
      _
    // Predicated region
    $region18: #{tpu_custom_call.1} parent=1 // pred_check
      _
    $region19: #{tpu_custom_call.1} parent=1 // pred_check_branch
      %430 = sbr.rel (0) target = $region21
    $region20: #{tpu_custom_call.1} parent=1 // pred_region
      %432 = dma.done [#allocation3], 640
    $region21: #{tpu_custom_call.1} parent=1 // pred_fallthru
      _
    %433 = vsyncpa [#allocation3], 1

</llo_original>
